<compile_context>
chip_gen: v6e
topology: v6e:2x2x1
jax: 0.10.0
libtpu: 0.0.40
codegen_flags: <defaults>
</compile_context>

<pallas_src>
import jax
import jax.numpy as jnp
from jax.experimental import pallas as pl
from jax.experimental.pallas import tpu as pltpu


def _mm_kernel(choice_ref, w_ref, x_ref, o_ref):
    # choice_ref: SMEM scalar (used only by the index_maps).
    # w_ref: (M, K) weight tile (choice already selected, leading dim squeezed).
    # x_ref: (K, tn) activation tile; o_ref: (M, tn) output tile.
    del choice_ref
    o_ref[...] = jnp.dot(
        w_ref[...], x_ref[...], preferred_element_type=jnp.float32
    ).astype(o_ref.dtype)


def _round_up(x, m):
    return ((x + m - 1) // m) * m


def param_dict_mm(w_stacked, choice_idx, x, *, tn=512):
    """Computes w_stacked[choice_idx] @ x with a single Pallas TPU kernel.

    w_stacked: (2, M, K) float32, choice_idx: (1,) int32, x: (K, N) float32.
    Returns (M, N).
    """
    _, M, K = w_stacked.shape
    K2, N = x.shape
    assert K == K2, f"inner dims mismatch: {K} vs {K2}"

    # Lane-dense tiling: last dim of every block is a multiple of 128
    # (or the full, already-padded extent).
    n_pad128 = _round_up(N, 128)
    tn_eff = min(tn, n_pad128)
    n_padded = _round_up(N, tn_eff)
    if n_padded != N:
        x = jnp.pad(x, ((0, 0), (0, n_padded - N)))

    grid = (n_padded // tn_eff,)

    out = pl.pallas_call(
        _mm_kernel,
        out_shape=jax.ShapeDtypeStruct((M, n_padded), x.dtype),
        grid_spec=pltpu.PrefetchScalarGridSpec(
            num_scalar_prefetch=1,
            grid=grid,
            in_specs=[
                # Weight: pick 'left'/'right' slab via the prefetched scalar;
                # stays resident across the whole N grid.
                pl.BlockSpec((pl.Squeezed(), M, K), lambda j, c: (c[0], 0, 0)),
                # Activation: lane-dense (K, tn) tile marching along N.
                pl.BlockSpec((K, tn_eff), lambda j, c: (0, j)),
            ],
            out_specs=pl.BlockSpec((M, tn_eff), lambda j, c: (0, j)),
        ),
        compiler_params=pltpu.CompilerParams(
            dimension_semantics=("parallel",),
        ),
    )(choice_idx, w_stacked, x)

    return out[:, :N] if n_padded != N else out


class MyModuleJAX:
    """JAX/Pallas port of the PyTorch MyModule with a ParameterDict."""

    _CHOICES = {"left": 0, "right": 1}

    def __init__(self, key):
        k_left, k_right = jax.random.split(key)
        # Same shapes as torch.randn(5, 10).
        self.params = {
            "left": jax.random.normal(k_left, (5, 10), dtype=jnp.float32),
            "right": jax.random.normal(k_right, (5, 10), dtype=jnp.float32),
        }
        # Single stacked buffer -> one compiled kernel serves both choices.
        self._stacked = jnp.stack(
            [self.params["left"], self.params["right"]], axis=0
        )

    def __call__(self, x, choice):
        idx = jnp.array([self._CHOICES[choice]], dtype=jnp.int32)
        return param_dict_mm(self._stacked, idx, x)


if __name__ == "__main__":
    key = jax.random.PRNGKey(0)
    k_params, k_x_small, k_x_big = jax.random.split(key, 3)

    module = MyModuleJAX(k_params)

    # Small case consistent with the module's forward: (5,10) @ (10,8) -> (5,8).
    x_small = jax.random.normal(k_x_small, (10, 8), dtype=jnp.float32)
    out_left = jax.block_until_ready(module(x_small, "left"))
    out_right = jax.block_until_ready(module(x_small, "right"))

    ref_left = module.params["left"] @ x_small
    ref_right = module.params["right"] @ x_small
    assert out_left.shape == (5, 8) and out_right.shape == (5, 8)
    assert jnp.allclose(out_left, ref_left, atol=1e-5, rtol=1e-5)
    assert jnp.allclose(out_right, ref_right, atol=1e-5, rtol=1e-5)

    # Larger N exercises the lane-dense multi-tile grid (2 tiles of 512).
    x_big = jax.random.normal(k_x_big, (10, 1024), dtype=jnp.float32)
    out_big = jax.block_until_ready(module(x_big, "right"))
    ref_big = module.params["right"] @ x_big
    assert out_big.shape == (5, 1024)
    assert jnp.allclose(out_big, ref_big, atol=1e-5, rtol=1e-5)

    print("KERNEL_OK")
</pallas_src>

<mosaic_0001>
module attributes {stable_mosaic.version = 11 : i64} {
  func.func @_mm_kernel(%arg0: i32, %arg1: memref<1xi32, #tpu.memory_space<smem>>, %arg2: memref<1x5x10xf32, #tpu.memory_space<vmem>>, %arg3: memref<10x128xf32, #tpu.memory_space<vmem>>, %arg4: memref<5x128xf32, #tpu.memory_space<vmem>>) attributes {dimension_semantics = [#tpu.dimension_semantics<parallel>], iteration_bounds = array<i64: 1>, scalar_prefetch = 1 : i64, scratch_operands = 0 : i64, tpu.core_type = #tpu.core_type<tc>, window_params = [{transform_indices = @transform_0, window_bounds = array<i64: 1, 5, 10>}, {transform_indices = @transform_1, window_bounds = array<i64: 10, 128>}, {transform_indices = @transform_2, window_bounds = array<i64: 5, 128>}]} {
    %c0 = arith.constant 0 : index
    %c0_0 = arith.constant 0 : index
    %c0_1 = arith.constant 0 : index
    %0 = vector.load %arg2[%c0, %c0_0, %c0_1] : memref<1x5x10xf32, #tpu.memory_space<vmem>>, vector<1x5x10xf32>
    %1 = vector.shape_cast %0 : vector<1x5x10xf32> to vector<5x10xf32>
    %c0_2 = arith.constant 0 : index
    %c0_3 = arith.constant 0 : index
    %2 = vector.load %arg3[%c0_2, %c0_3] : memref<10x128xf32, #tpu.memory_space<vmem>>, vector<10x128xf32>
    %cst = arith.constant dense<0.000000e+00> : vector<5x128xf32>
    %3 = tpu.matmul %1, %2, %cst {dimension_numbers = #tpu.dot_dimension_numbers<[1], [0], [0], [1], [0, 0, 1, 1], [], []>} : vector<5x10xf32>, vector<10x128xf32>, vector<5x128xf32> -> vector<5x128xf32>
    %c0_4 = arith.constant 0 : index
    %c0_5 = arith.constant 0 : index
    %4 = vector.load %arg4[%c0_4, %c0_5] : memref<5x128xf32, #tpu.memory_space<vmem>>, vector<5x128xf32>
    tpu.vector_store %arg4[%c0_4, %c0_5], %3 {strides = array<i32>} : memref<5x128xf32, #tpu.memory_space<vmem>>, vector<5x128xf32>,
    return
  }
  func.func @transform_0(%arg0: i32, %arg1: memref<1xi32, #tpu.memory_space<smem>>) -> (i32, i32, i32) {
    %c0 = arith.constant 0 : index
    %0 = memref.load %arg1[%c0] : memref<1xi32, #tpu.memory_space<smem>>
    %c0_i32 = arith.constant 0 : i32
    %c0_i32_0 = arith.constant 0 : i32
    %c0_i32_1 = arith.constant 0 : i32
    return %0, %c0_i32, %c0_i32_0 : i32, i32, i32
  }
  func.func @transform_1(%arg0: i32, %arg1: memref<1xi32, #tpu.memory_space<smem>>) -> (i32, i32) {
    %c0_i32 = arith.constant 0 : i32
    %c0_i32_0 = arith.constant 0 : i32
    return %c0_i32, %arg0 : i32, i32
  }
  func.func @transform_2(%arg0: i32, %arg1: memref<1xi32, #tpu.memory_space<smem>>) -> (i32, i32) {
    %c0_i32 = arith.constant 0 : i32
    %c0_i32_0 = arith.constant 0 : i32
    return %c0_i32, %arg0 : i32, i32
  }
}

</mosaic_0001>

<llo_original>
// kernel: tpu_custom_call.1
$region0: #{tpu_custom_call.1}
  #allocation0 [shape = 'u32[]', space=smem, size = 0x4, offset = 0x4, fixed_abs, tag = 'smem constant byte address 0x4 - core index']
  #allocation1 [shape = 'u32[144,128]{1,0:T(1,128)}', space=vmem, size = 0x12000, scoped, tag = 'internal scratch']
  #allocation2 [shape = 's32[1]{0}', space=sflag, size = 0x4, scoped, tag = 'scoped memory for tpu_custom_call.1']
  #allocation3 [shape = 's32[1]{0:T(128)S(6)}', space=smem, size = 0x200, scoped, tag = 'prefetched SMEM operand 0']
  %s0 = inlined_call_operand.<no memory space> [shape: s32[1], index: 0, kind: input, shape index: {}]
  %s1 = inlined_call_operand.vmem [shape: f32[2,5,10], index: 1, kind: input, shape index: {}]
  %s2 = inlined_call_operand.vmem [shape: f32[10,128], index: 2, kind: input, shape index: {}]
  %s3 = inlined_call_operand.hbm [shape: f32[5,128], index: 3, kind: output, shape index: {}]
  %s4 = sld [smem:[#allocation0]]
  $region18: #{tpu_custom_call.1} parent=0
    _
  %s6 = ssub.s32 1, %s4
  %s7 = scalar_select 0, %s6, %s4
  %8 = sst [smem:[#allocation3]] %s0
  $region1: #{tpu_custom_call.1} parent=0
    #allocation4 [shape = 'u8[4096]{0}', space=vmem, size = 0x1000, scoped, tag = 'output window, operand 0, single buffered']
    #allocation5 [shape = 's32[1]{0}', space=sflag, size = 0x4, scoped, tag = 'scoped memory for tpu_custom_call.1']
    %9 = vsyncpa [#allocation5], 0
    // Predicated region
    $region2: #{tpu_custom_call.1} parent=1 // pred_check
      _
    $region3: #{tpu_custom_call.1} parent=1 // pred_check_branch
      %11 = sbr.rel (0) target = $region5
    $region4: #{tpu_custom_call.1} parent=1 // pred_region
      %s12 = sld [smem:[#allocation3]]
      %p13 = scmp.lt.s32.totalorder %s12, 1
      %s14 = scalar_select %p13, %s12, 1
      %s15 = smul.addr %s14, 8
      %s16 = scalar_lea.vmem %s1, %s15
      %s17 = sld [smem:[#allocation3]]
    $region5: #{tpu_custom_call.1} parent=1 // pred_fallthru
      _
    // Predicated region
    $region6: #{tpu_custom_call.1} parent=1 // pred_check
      _
    $region7: #{tpu_custom_call.1} parent=1 // pred_check_branch
      %19 = sbr.rel (0) target = $region9
    $region8: #{tpu_custom_call.1} parent=1 // pred_region
      _
    $region9: #{tpu_custom_call.1} parent=1 // pred_fallthru
      _
    %s20 = sld [smem:[#allocation3]]
    %p21 = scmp.lt.s32.totalorder %s20, 1
    %s22 = scalar_select %p21, %s20, 1
    %s23 = smul.addr %s22, 8
    %s24 = scalar_lea.vmem %s1, %s23
    %s25 = sld [smem:[#allocation3]]
    %p26 = scmp.lt.s32.totalorder %s25, 1
    %s27 = scalar_select %p26, %s25, 1
    %s28 = smul.addr %s27, 8
    %s29 = scalar_lea.vmem %s1, %s28
    %s30 = sld [smem:[#allocation3]]
    %v31 = vld [vmem:[%s29] sm:$0x1f]
    %v32 = vld [vmem:[%s2] sm:$0xff]
    %v33 = vld [vmem:[%s2 + $0x8] sm:$0x3]
    %vm34 = vcmask 80896
    %v36 = vsel %vm34, %v31, 0
    %vm38 = vcmask 1041408
    %v40 = vsel %vm38, %v33, 0
    %42 = vmatprep.subr.mxu0 0.0
    %43 = vmatpush1.msra.mxu0 0.0
    %44 = vmatprep.subr.mxu0 0.0
    %45 = vmatpush1.msra.mxu0 0.0
    %46 = vmatprep.subr.mxu0 0.0
    %47 = vmatpush1.msra.mxu0 0.0
    %48 = vmatprep.subr.mxu0 0.0
    %49 = vmatpush1.msra.mxu0 0.0
    %50 = vmatprep.subr.mxu0 0.0
    %51 = vmatpush1.msra.mxu0 0.0
    %52 = vmatprep.subr.mxu0 0.0
    %53 = vmatpush1.msra.mxu0 0.0
    %54 = vmatprep.subr.mxu0 0.0
    %55 = vmatpush1.msra.mxu0 0.0
    %56 = vmatprep.subr.mxu0 0.0
    %57 = vmatpush1.msra.mxu0 0.0
    %58 = vmatprep.subr.mxu0 0.0
    %59 = vmatpush1.msra.mxu0 0.0
    %60 = vmatprep.subr.mxu0 0.0
    %61 = vmatpush1.msra.mxu0 0.0
    %62 = vmatprep.subr.mxu0 0.0
    %63 = vmatpush1.msra.mxu0 0.0
    %64 = vmatprep.subr.mxu0 0.0
    %65 = vmatpush1.msra.mxu0 0.0
    %66 = vmatprep.subr.mxu0 0.0
    %67 = vmatpush1.msra.mxu0 0.0
    %68 = vmatprep.subr.mxu0 0.0
    %69 = vmatpush1.msra.mxu0 0.0
    %70 = vmatprep.subr.mxu0 0.0
    %71 = vmatpush1.msra.mxu0 %v40
    %72 = vmatprep.subr.mxu0 0.0
    %73 = vmatpush1.msra.mxu0 %v32
    %74 = vmatprep.subr.mxu0 0.0
    %75 = vmatpush2.msra.mxu0 0.0
    %76 = vmatprep.subr.mxu0 0.0
    %77 = vmatpush2.msra.mxu0 0.0
    %78 = vmatprep.subr.mxu0 0.0
    %79 = vmatpush2.msra.mxu0 0.0
    %80 = vmatprep.subr.mxu0 0.0
    %81 = vmatpush2.msra.mxu0 0.0
    %82 = vmatprep.subr.mxu0 0.0
    %83 = vmatpush2.msra.mxu0 0.0
    %84 = vmatprep.subr.mxu0 0.0
    %85 = vmatpush2.msra.mxu0 0.0
    %86 = vmatprep.subr.mxu0 0.0
    %87 = vmatpush2.msra.mxu0 0.0
    %88 = vmatprep.subr.mxu0 0.0
    %89 = vmatpush2.msra.mxu0 0.0
    %90 = vmatprep.subr.mxu0 0.0
    %91 = vmatpush2.msra.mxu0 0.0
    %92 = vmatprep.subr.mxu0 0.0
    %93 = vmatpush2.msra.mxu0 0.0
    %94 = vmatprep.subr.mxu0 0.0
    %95 = vmatpush2.msra.mxu0 0.0
    %96 = vmatprep.subr.mxu0 0.0
    %97 = vmatpush2.msra.mxu0 0.0
    %98 = vmatprep.subr.mxu0 0.0
    %99 = vmatpush2.msra.mxu0 0.0
    %100 = vmatprep.subr.mxu0 0.0
    %101 = vmatpush2.msra.mxu0 0.0
    %102 = vmatprep.subr.mxu0 0.0
    %103 = vmatpush2.msra.mxu0 0.0
    %104 = vmatprep.subr.mxu0 0.0
    %105 = vmatpush2.msra.mxu0 0.0
    %106 = vmatprep.mubr.f32.mxu0 0.0
    %107 = vmatmul.mubr.f32.gmra.mxu0 %v36
    %v108 = vpop.f32.mrf.mxu0
    %v109 = vadd.f32 0.0, %v108
    %v110 = vpop.f32.mrf.mxu0
    %111 = vdwg.mxu0
    %112 = vst [vmem:[#allocation4] sm:$0x1f] %v109
    // Predicated region
    $region10: #{tpu_custom_call.1} parent=1 // pred_check
      _
    $region11: #{tpu_custom_call.1} parent=1 // pred_check_branch
      %114 = sbr.rel (0) target = $region13
    $region12: #{tpu_custom_call.1} parent=1 // pred_region
      %s116 = ssub.s32 128, 128
      %117 = vsyncadd [#allocation5], %s116
      %s119 = sshll.u32 [#allocation4], 4
      %s120 = int_to_ptr.vmem [resolvable:$true] %s119
      %122 = dma.vmem_to_hbm [thread:$0]  %s120, 128, %s3, [#allocation5]
    $region13: #{tpu_custom_call.1} parent=1 // pred_fallthru
      _
    // Predicated region
    $region14: #{tpu_custom_call.1} parent=1 // pred_check
      _
    $region15: #{tpu_custom_call.1} parent=1 // pred_check_branch
      %124 = sbr.rel (0) target = $region17
    $region16: #{tpu_custom_call.1} parent=1 // pred_region
      %125 = dma.done [#allocation5], 128
    $region17: #{tpu_custom_call.1} parent=1 // pred_fallthru
      _
    %126 = vsyncpa [#allocation5], 1

</llo_original>
